<compile_context>
chip_gen: v6e
topology: v6e:2x2x1
jax: 0.10.0
libtpu: 0.0.40
codegen_flags: <defaults>
</compile_context>

<pallas_src>
import functools

import jax
import jax.numpy as jnp
from jax import lax
from jax.experimental import pallas as pl
from jax.experimental.pallas import tpu as pltpu


def _conv1d_window_kernel(x_ref, h_ref, w_ref, b_ref, o_ref, *, K):
    # x_ref: (tile_s, E)  main input tile (x_pad rows [s*tile_s, (s+1)*tile_s))
    # h_ref: (HALO, E)    right halo: first HALO rows of the next seq tile
    # w_ref: (K*E, E)     tap-fused weights (tap-major along the contraction dim)
    # b_ref: (1, E)       bias (f32)
    # o_ref: (tile_s, E)  lane-dense output tile
    tile_s = o_ref.shape[0]
    full = jnp.concatenate([x_ref[...], h_ref[...]], axis=0)     # (tile_s+HALO, E)
    # Build the shifted window once per step (static slices, no dynamic ds),
    # then contract all K taps in a single MXU matmul.
    parts = [lax.slice_in_dim(full, k, k + tile_s, axis=0) for k in range(K)]
    window = parts[0] if K == 1 else jnp.concatenate(parts, axis=1)  # (tile_s, K*E)
    acc = jnp.dot(window, w_ref[...], preferred_element_type=jnp.float32)
    # implicit (1, E) -> (tile_s, E) bias broadcast
    o_ref[...] = (acc + b_ref[...]).astype(o_ref.dtype)


def conv_permute_forward(x, weight, bias, *, padding, tile_s_max=None,
                         use_bf16=True):
    """x: (B, S, E); weight: (E_out, E_in, K) PyTorch Conv1d layout; bias: (E,)."""
    B, S, E = x.shape
    E_out, E_in, K = weight.shape
    assert E_in == E and E_out == E, "ConvPermute uses in_channels == out_channels"
    S_out = S + 2 * padding - K + 1
    assert S_out > 0

    # Halo rows (taps k >= 1 reach into the next tile), sublane-aligned.
    HALO = max(8, ((K - 1 + 7) // 8) * 8)

    # Seq-tile size: big enough to amortize the ~0.35 us per-step overhead
    # (larger tiles for small E), small enough to bound VMEM independent of S.
    if tile_s_max is None:
        tile_s_max = 2048 if E <= 256 else (1024 if E <= 512 else 512)
    tile_s = min(tile_s_max, ((S_out + HALO - 1) // HALO) * HALO)
    tile_s = max(HALO, (tile_s // HALO) * HALO)      # multiple of HALO (and of 8)
    n_tiles = pl.cdiv(S_out, tile_s)
    halo_stride = tile_s // HALO

    # Pad so every *input* block (main + halo) is fully in-bounds; only the last
    # *output* tile may be partial, and Pallas masks that store.
    S_in_pad = n_tiles * tile_s + HALO
    compute_dtype = jnp.bfloat16 if use_bf16 else x.dtype
    # TODO(synk): the conv zero-padding could be applied in-kernel (masking the
    # first/last tile's halo rows) to remove this one extra HBM copy of x.
    x_prep = jnp.pad(
        x, ((0, 0), (padding, S_in_pad - S - padding), (0, 0))
    ).astype(compute_dtype)

    # Tap-fused weights: Wf[k*E + i, o] = weight[o, i, k].
    wf = jnp.transpose(weight, (2, 1, 0)).reshape(K * E, E).astype(compute_dtype)
    b2 = bias.reshape(1, E).astype(jnp.float32)

    flops = 2 * B * S_out * E * E * K
    bytes_accessed = int(
        x_prep.size * x_prep.dtype.itemsize
        + wf.size * wf.dtype.itemsize
        + b2.size * b2.dtype.itemsize
        + B * S_out * E * x.dtype.itemsize)

    kernel = functools.partial(_conv1d_window_kernel, K=K)

    # TODO(synk): on jax versions where it is supported, mark the grid-invariant
    # weight/bias specs pipeline_mode=pl.Buffered(1) to drop their second VMEM
    # buffer (matters for large E on v7x's 64 MiB/TC budget).
    out = pl.pallas_call(
        kernel,
        out_shape=jax.ShapeDtypeStruct((B, S_out, E), x.dtype),
        grid_spec=pltpu.PrefetchScalarGridSpec(
            num_scalar_prefetch=0,
            grid=(B, n_tiles),
            in_specs=[
                # main seq tile for (batch b, seq tile s)
                pl.BlockSpec((None, tile_s, E), lambda b, s: (b, s, 0)),
                # right halo: first HALO rows of the *next* seq tile
                pl.BlockSpec((None, HALO, E),
                             lambda b, s: (b, (s + 1) * halo_stride, 0)),
                # grid-invariant fused weights and bias (fetched once)
                pl.BlockSpec((K * E, E), lambda b, s: (0, 0)),
                pl.BlockSpec((1, E), lambda b, s: (0, 0)),
            ],
            out_specs=pl.BlockSpec((None, tile_s, E), lambda b, s: (b, s, 0)),
        ),
        compiler_params=pltpu.CompilerParams(
            dimension_semantics=("parallel", "parallel")),
        cost_estimate=pl.CostEstimate(flops=flops, transcendentals=0,
                                      bytes_accessed=bytes_accessed),
    )(x_prep, x_prep, wf, b2)
    return out


if __name__ == "__main__":
    def _ref_conv(x, weight, bias, padding):
        # Same Conv1d-with-permutes semantics via lax.conv (NWC layout).
        return lax.conv_general_dilated(
            x, jnp.transpose(weight, (2, 1, 0)),
            window_strides=(1,), padding=[(padding, padding)],
            dimension_numbers=("NWC", "WIO", "NWC")) + bias[None, None, :]

    key = jax.random.PRNGKey(0)
    kx, kw, kb = jax.random.split(key, 3)

    # Main config (emb multiple of 128 -> lane-dense output tiles).
    B, S, E, K, P = 2, 16, 128, 3, 1
    x = jax.random.normal(kx, (B, S, E), dtype=jnp.float32)
    weight = 0.05 * jax.random.normal(kw, (E, E, K), dtype=jnp.float32)
    bias = 0.05 * jax.random.normal(kb, (E,), dtype=jnp.float32)

    out = jax.block_until_ready(conv_permute_forward(x, weight, bias, padding=P))
    ref = _ref_conv(x, weight, bias, P)
    s_out = S + 2 * P - K + 1
    assert out.shape == (B, s_out, E), out.shape
    assert jnp.allclose(out, ref, atol=5e-2, rtol=5e-2), (
        "max abs diff = %g" % float(jnp.max(jnp.abs(out - ref))))

    # Secondary config: multiple seq tiles with a partial tail tile — exercises
    # the cross-tile halo spec and the masked partial output block (f32 path).
    S2 = 13
    x2 = jax.random.normal(kx, (B, S2, E), dtype=jnp.float32)
    out2 = jax.block_until_ready(
        conv_permute_forward(x2, weight, bias, padding=P, tile_s_max=8,
                             use_bf16=False))
    ref2 = _ref_conv(x2, weight, bias, P)
    s_out2 = S2 + 2 * P - K + 1
    assert out2.shape == (B, s_out2, E), out2.shape
    assert jnp.allclose(out2, ref2, atol=5e-2, rtol=5e-2), (
        "max abs diff = %g" % float(jnp.max(jnp.abs(out2 - ref2))))

    print("KERNEL_OK")
</pallas_src>

<mosaic_0001>
module attributes {stable_mosaic.version = 11 : i64} {
  func.func @_conv1d_window_kernel(%arg0: i32, %arg1: i32, %arg2: memref<1x16x128xbf16, #tpu.memory_space<vmem>>, %arg3: memref<1x8x128xbf16, #tpu.memory_space<vmem>>, %arg4: memref<384x128xbf16, #tpu.memory_space<vmem>>, %arg5: memref<1x128xf32, #tpu.memory_space<vmem>>, %arg6: memref<1x16x128xf32, #tpu.memory_space<vmem>>) attributes {dimension_semantics = [#tpu.dimension_semantics<parallel>, #tpu.dimension_semantics<parallel>], iteration_bounds = array<i64: 2, 1>, scalar_prefetch = 0 : i64, scratch_operands = 0 : i64, tpu.core_type = #tpu.core_type<tc>, window_params = [{transform_indices = @transform_0, window_bounds = array<i64: 1, 16, 128>}, {transform_indices = @transform_1, window_bounds = array<i64: 1, 8, 128>}, {pipeline_mode = #tpu.pipeline_mode<synchronous>, transform_indices = @transform_2, window_bounds = array<i64: 384, 128>}, {pipeline_mode = #tpu.pipeline_mode<synchronous>, transform_indices = @transform_3, window_bounds = array<i64: 1, 128>}, {transform_indices = @transform_4, window_bounds = array<i64: 1, 16, 128>}]} {
    %c0 = arith.constant 0 : index
    %c0_0 = arith.constant 0 : index
    %c0_1 = arith.constant 0 : index
    %0 = vector.load %arg2[%c0, %c0_0, %c0_1] : memref<1x16x128xbf16, #tpu.memory_space<vmem>>, vector<1x16x128xbf16>
    %1 = vector.shape_cast %0 : vector<1x16x128xbf16> to vector<16x128xbf16>
    %c0_2 = arith.constant 0 : index
    %c0_3 = arith.constant 0 : index
    %c0_4 = arith.constant 0 : index
    %2 = vector.load %arg3[%c0_2, %c0_3, %c0_4] : memref<1x8x128xbf16, #tpu.memory_space<vmem>>, vector<1x8x128xbf16>
    %3 = vector.shape_cast %2 : vector<1x8x128xbf16> to vector<8x128xbf16>
    %4 = tpu.concatenate %1, %3 in 0 : vector<16x128xbf16>, vector<8x128xbf16> -> vector<24x128xbf16>
    %5 = vector.extract_strided_slice %4 {offsets = [0, 0], sizes = [16, 128], strides = [1, 1]} : vector<24x128xbf16> to vector<16x128xbf16>
    %6 = vector.extract_strided_slice %4 {offsets = [1, 0], sizes = [16, 128], strides = [1, 1]} : vector<24x128xbf16> to vector<16x128xbf16>
    %7 = vector.extract_strided_slice %4 {offsets = [2, 0], sizes = [16, 128], strides = [1, 1]} : vector<24x128xbf16> to vector<16x128xbf16>
    %8 = tpu.concatenate %5, %6, %7 in 1 : vector<16x128xbf16>, vector<16x128xbf16>, vector<16x128xbf16> -> vector<16x384xbf16>
    %c0_5 = arith.constant 0 : index
    %c0_6 = arith.constant 0 : index
    %9 = vector.load %arg4[%c0_5, %c0_6] : memref<384x128xbf16, #tpu.memory_space<vmem>>, vector<384x128xbf16>
    %cst = arith.constant dense<0.000000e+00> : vector<16x128xf32>
    %10 = tpu.matmul %8, %9, %cst {dimension_numbers = #tpu.dot_dimension_numbers<[1], [0], [0], [1], [0, 0, 1, 1], [], []>} : vector<16x384xbf16>, vector<384x128xbf16>, vector<16x128xf32> -> vector<16x128xf32>
    %c0_7 = arith.constant 0 : index
    %c0_8 = arith.constant 0 : index
    %11 = vector.load %arg5[%c0_7, %c0_8] : memref<1x128xf32, #tpu.memory_space<vmem>>, vector<1x128xf32>
    %12 = vector.broadcast %11 : vector<1x128xf32> to vector<16x128xf32>
    %13 = arith.addf %10, %12 : vector<16x128xf32>
    %c0_9 = arith.constant 0 : index
    %c0_10 = arith.constant 0 : index
    %c0_11 = arith.constant 0 : index
    %14 = vector.load %arg6[%c0_9, %c0_10, %c0_11] : memref<1x16x128xf32, #tpu.memory_space<vmem>>, vector<1x16x128xf32>
    %15 = vector.shape_cast %14 : vector<1x16x128xf32> to vector<16x128xf32>
    %16 = vector.shape_cast %13 : vector<16x128xf32> to vector<1x16x128xf32>
    tpu.vector_store %arg6[%c0_9, %c0_10, %c0_11], %16 {strides = array<i32>} : memref<1x16x128xf32, #tpu.memory_space<vmem>>, vector<1x16x128xf32>,
    return
  }
  func.func @transform_0(%arg0: i32, %arg1: i32) -> (i32, i32, i32) {
    %c0_i32 = arith.constant 0 : i32
    %c0_i32_0 = arith.constant 0 : i32
    return %arg0, %arg1, %c0_i32 : i32, i32, i32
  }
  func.func @transform_1(%arg0: i32, %arg1: i32) -> (i32, i32, i32) {
    %c1_i32 = arith.constant 1 : i32
    %0 = arith.addi %arg1, %c1_i32 : i32
    %c2_i32 = arith.constant 2 : i32
    %1 = arith.muli %0, %c2_i32 : i32
    %c0_i32 = arith.constant 0 : i32
    %c0_i32_0 = arith.constant 0 : i32
    return %arg0, %1, %c0_i32 : i32, i32, i32
  }
  func.func @transform_2(%arg0: i32, %arg1: i32) -> (i32, i32) {
    %c0_i32 = arith.constant 0 : i32
    %c0_i32_0 = arith.constant 0 : i32
    %c0_i32_1 = arith.constant 0 : i32
    return %c0_i32, %c0_i32_0 : i32, i32
  }
  func.func @transform_3(%arg0: i32, %arg1: i32) -> (i32, i32) {
    %c0_i32 = arith.constant 0 : i32
    %c0_i32_0 = arith.constant 0 : i32
    %c0_i32_1 = arith.constant 0 : i32
    return %c0_i32, %c0_i32_0 : i32, i32
  }
  func.func @transform_4(%arg0: i32, %arg1: i32) -> (i32, i32, i32) {
    %c0_i32 = arith.constant 0 : i32
    %c0_i32_0 = arith.constant 0 : i32
    return %arg0, %arg1, %c0_i32 : i32, i32, i32
  }
}

</mosaic_0001>

<llo_original>
// kernel: tpu_custom_call.1
$region0: #{tpu_custom_call.1}
  #allocation0 [shape = 'u32[]', space=smem, size = 0x4, offset = 0x4, fixed_abs, tag = 'smem constant byte address 0x4 - core index']
  #allocation1 [shape = 'u32[144,128]{1,0:T(1,128)}', space=vmem, size = 0x12000, scoped, tag = 'internal scratch']
  %s0 = inlined_call_operand.hbm [shape: bf16[2,24,128], index: 0, kind: input, shape index: {}]
  %s1 = inlined_call_operand.hbm [shape: bf16[2,24,128], index: 1, kind: input, shape index: {}]
  %s2 = inlined_call_operand.hbm [shape: bf16[384,128], index: 2, kind: input, shape index: {}]
  %s3 = inlined_call_operand.vmem [shape: f32[1,128], index: 3, kind: input, shape index: {}]
  %s4 = inlined_call_operand.hbm [shape: f32[2,16,128], index: 4, kind: output, shape index: {}]
  %s5 = sld [smem:[#allocation0]]
  $region61: #{tpu_custom_call.1} parent=0
    _
  %s7 = ssub.s32 1, %s5
  %s8 = scalar_select 0, %s7, %s5
  $region1: #{tpu_custom_call.1} parent=0
    #allocation2 [shape = 'u8[8192]{0}', space=vmem, size = 0x2000, scoped, tag = 'input window, operand 0']
    #allocation3 [shape = 's32[2]{0}', space=sflag, size = 0x8, scoped, tag = 'scoped memory for tpu_custom_call.1']
    #allocation4 [shape = 's32[2]{0}', space=sflag, size = 0x8, scoped, tag = 'scoped memory for tpu_custom_call.1']
    #allocation5 [shape = 'u8[4096]{0}', space=vmem, size = 0x1000, scoped, tag = 'input window, operand 1']
    #allocation6 [shape = 's32[2]{0}', space=sflag, size = 0x8, scoped, tag = 'scoped memory for tpu_custom_call.1']
    #allocation7 [shape = 'u8[98304]{0}', space=vmem, size = 0x18000, scoped, tag = 'input window, operand 2, single buffered']
    #allocation8 [shape = 'u8[16384]{0}', space=vmem, size = 0x4000, scoped, tag = 'output window, operand 0']
    %9 = vsyncpa [#allocation3], 0
    %s10 = scalar_lea.sflag [#allocation3], 1
    %11 = vsyncpa %s10, 0
    %12 = vsyncpa [#allocation6], 0
    %s13 = scalar_lea.sflag [#allocation6], 1
    %14 = vsyncpa %s13, 0
    %15 = vsyncpa [#allocation4], 0
    %s16 = scalar_lea.sflag [#allocation4], 1
    %17 = vsyncpa %s16, 0
    loop: start=0, step=1, limit=4
    $region2: #{tpu_custom_call.1} parent=1 // loop_pre_header
      _
    $region3: #{tpu_custom_call.1} parent=1 // loop_header
      %s19 = sphi 0, %s23
      %p20 = scmp.ge.s32.totalorder %s19, 4
      %s26 = sphi 0, %s38
      %s27 = sphi 0, %s34
      %s28 = sphi 0, %s26
      %s29 = sphi 0, %s27
      %s30 = sphi 0, %s28
      %s31 = sphi 0, %s29
      %s43 = sphi 0, %s45
      %s46 = sphi 0, %s43
      %s47 = sphi 0, %s46
      %s63 = sphi 0, %s47
      %s75 = sphi 0, %s77
      %s78 = sphi 0, %s75
      %s79 = sphi 0, %s78
      %s95 = sphi 0, %s79
      %s99 = sphi 0, %s99
      %s101 = sphi 0, %s99
      %s102 = sphi 0, %s101
      %s116 = sphi 0, %s102
      %s120 = sphi 0, %s120
      %s122 = sphi 0, %s120
      %s123 = sphi 0, %s122
      %s137 = sphi 0, %s123
      %s145 = sphi 0, %s147
      %s148 = sphi 0, %s145
      %s149 = sphi 0, %s148
      %s165 = sphi 0, %s149
    $region4: #{tpu_custom_call.1} parent=1 // loop_header_branch
      %22 = sbr.rel (%p20) target = $region8
    $region5: #{tpu_custom_call.1} parent=1 // loop_body
      %s24 = ssub.s32 %s19, 1
      %s25 = ssub.s32 %s19, 2
      %s32 = sadd.s32 1, %s27
      %p33 = scmp.ge.s32.totalorder %s32, 1
      %s34 = scalar_select %p33, 0, %s32
      %s35 = sadd.s32 1, %s26
      %s36 = scalar_select %p33, %s35, %s26
      %p37 = scmp.ge.s32.totalorder %s36, 2
      %s38 = scalar_select %p37, 0, %s36
      %s39 = ssub.s32 %s26, %s38
      %s40 = ssub.s32 %s27, %s34
      %s41 = sor.u32 %s39, %s40
      %p42 = scmp.eq.s32.totalorder %s41, 0
      %s44 = sadd.s32 %s43, 1
      %s45 = scalar_select %p42, %s43, %s44
      %p48 = pneg %p42
      %p49 = scmp.eq.s32.totalorder %s19, 1
      %p50 = por %p48, %p49
      %p51 = scmp.ne.s32.totalorder %s43, %s46
      %p52 = scmp.eq.s32.totalorder %s19, 0
      %p53 = por %p51, %p52
      %p54 = scmp.ne.s32.totalorder %s43, %s46
      %p55 = scmp.eq.s32.totalorder %s24, 1
      %p56 = por %p54, %p55
      %p57 = scmp.ne.s32.totalorder %s46, %s47
      %p58 = scmp.eq.s32.totalorder %s24, 0
      %p59 = por %p57, %p58
      %p60 = scmp.ne.s32.totalorder %s46, %s47
      %p61 = scmp.eq.s32.totalorder %s25, 1
      %p62 = por %p60, %p61
      %p64 = scmp.ne.s32.totalorder %s47, %s63
      %p65 = scmp.eq.s32.totalorder %s25, 0
      %p66 = por %p64, %p65
      %s67 = sadd.s32 %s27, 1
      %s68 = smul.u32 %s67, 2
      %s69 = sadd.s32 %s34, 1
      %s70 = smul.u32 %s69, 2
      %s71 = ssub.s32 %s26, %s38
      %s72 = ssub.s32 %s68, %s70
      %s73 = sor.u32 %s71, %s72
      %p74 = scmp.eq.s32.totalorder %s73, 0
      %s76 = sadd.s32 %s75, 1
      %s77 = scalar_select %p74, %s75, %s76
      %p80 = pneg %p74
      %p81 = scmp.eq.s32.totalorder %s19, 1
      %p82 = por %p80, %p81
      %p83 = scmp.ne.s32.totalorder %s75, %s78
      %p84 = scmp.eq.s32.totalorder %s19, 0
      %p85 = por %p83, %p84
      %p86 = scmp.ne.s32.totalorder %s75, %s78
      %p87 = scmp.eq.s32.totalorder %s24, 1
      %p88 = por %p86, %p87
      %p89 = scmp.ne.s32.totalorder %s78, %s79
      %p90 = scmp.eq.s32.totalorder %s24, 0
      %p91 = por %p89, %p90
      %p92 = scmp.ne.s32.totalorder %s78, %s79
      %p93 = scmp.eq.s32.totalorder %s25, 1
      %p94 = por %p92, %p93
      %p96 = scmp.ne.s32.totalorder %s79, %s95
      %p97 = scmp.eq.s32.totalorder %s25, 0
      %p98 = por %p96, %p97
      %s100 = sadd.s32 %s99, 1
      %p103 = scmp.eq.s32.totalorder %s19, 1
      %p104 = scmp.ne.s32.totalorder %s99, %s101
      %p105 = scmp.eq.s32.totalorder %s19, 0
      %p106 = por %p104, %p105
      %p107 = scmp.ne.s32.totalorder %s99, %s101
      %p108 = scmp.eq.s32.totalorder %s24, 1
      %p109 = por %p107, %p108
      %p110 = scmp.ne.s32.totalorder %s101, %s102
      %p111 = scmp.eq.s32.totalorder %s24, 0
      %p112 = por %p110, %p111
      %p113 = scmp.ne.s32.totalorder %s101, %s102
      %p114 = scmp.eq.s32.totalorder %s25, 1
      %p115 = por %p113, %p114
      %p117 = scmp.ne.s32.totalorder %s102, %s116
      %p118 = scmp.eq.s32.totalorder %s25, 0
      %p119 = por %p117, %p118
      %s121 = sadd.s32 %s120, 1
      %p124 = scmp.eq.s32.totalorder %s19, 1
      %p125 = scmp.ne.s32.totalorder %s120, %s122
      %p126 = scmp.eq.s32.totalorder %s19, 0
      %p127 = por %p125, %p126
      %p128 = scmp.ne.s32.totalorder %s120, %s122
      %p129 = scmp.eq.s32.totalorder %s24, 1
      %p130 = por %p128, %p129
      %p131 = scmp.ne.s32.totalorder %s122, %s123
      %p132 = scmp.eq.s32.totalorder %s24, 0
      %p133 = por %p131, %p132
      %p134 = scmp.ne.s32.totalorder %s122, %s123
      %p135 = scmp.eq.s32.totalorder %s25, 1
      %p136 = por %p134, %p135
      %p138 = scmp.ne.s32.totalorder %s123, %s137
      %p139 = scmp.eq.s32.totalorder %s25, 0
      %p140 = por %p138, %p139
      %s141 = ssub.s32 %s26, %s38
      %s142 = ssub.s32 %s27, %s34
      %s143 = sor.u32 %s141, %s142
      %p144 = scmp.eq.s32.totalorder %s143, 0
      %s146 = sadd.s32 %s145, 1
      %s147 = scalar_select %p144, %s145, %s146
      %p150 = pneg %p144
      %p151 = scmp.eq.s32.totalorder %s19, 1
      %p152 = por %p150, %p151
      %p153 = scmp.ne.s32.totalorder %s145, %s148
      %p154 = scmp.eq.s32.totalorder %s19, 0
      %p155 = por %p153, %p154
      %p156 = scmp.ne.s32.totalorder %s145, %s148
      %p157 = scmp.eq.s32.totalorder %s24, 1
      %p158 = por %p156, %p157
      %p159 = scmp.ne.s32.totalorder %s148, %s149
      %p160 = scmp.eq.s32.totalorder %s24, 0
      %p161 = por %p159, %p160
      %p162 = scmp.ne.s32.totalorder %s148, %s149
      %p163 = scmp.eq.s32.totalorder %s25, 1
      %p164 = por %p162, %p163
      %p166 = scmp.ne.s32.totalorder %s149, %s165
      %p167 = scmp.eq.s32.totalorder %s25, 0
      %p168 = por %p166, %p167
      %p169 = scmp.le.s32.totalorder 1, %s19
      %p170 = scmp.lt.s32.totalorder %s19, 3
      %p171 = pnand %p169, %p170
      %p172 = pneg %p171
      // Predicated region
      $region9: #{tpu_custom_call.1} parent=5 // pred_check
        _
      $region10: #{tpu_custom_call.1} parent=5 // pred_check_branch
        %174 = sbr.rel (%p171) target = $region12
      $region11: #{tpu_custom_call.1} parent=5 // pred_region
        %s175 = ssub.s32 %s19, 1
        // Predicated region
        $region13: #{tpu_custom_call.1} parent=11 // pred_check
          %p176 = pneg %p112
        $region14: #{tpu_custom_call.1} parent=11 // pred_check_branch
          %178 = sbr.rel (%p176) target = $region16
        $region15: #{tpu_custom_call.1} parent=11 // pred_region
          %s180 = ssub.s32 3072, 3072
          %181 = vsyncadd [#allocation6], %s180
          %s182 = sshll.u32 [#allocation7], 4
          %s183 = int_to_ptr.vmem [resolvable:$true] %s182
          %188 = dma.hbm_to_vmem [thread:$0]  %s2, 3072, %s183, [#allocation6], 64, 64, 4
        $region16: #{tpu_custom_call.1} parent=11 // pred_fallthru
          _
        // Predicated region
        $region17: #{tpu_custom_call.1} parent=11 // pred_check
          %p189 = pneg %p133
        $region18: #{tpu_custom_call.1} parent=11 // pred_check_branch
          %191 = sbr.rel (%p189) target = $region20
        $region19: #{tpu_custom_call.1} parent=11 // pred_region
          _
        $region20: #{tpu_custom_call.1} parent=11 // pred_fallthru
          _
      $region12: #{tpu_custom_call.1} parent=5 // pred_fallthru
        _
      %p192 = scmp.lt.s32.totalorder %s19, 2
      // Predicated region
      $region21: #{tpu_custom_call.1} parent=5 // pred_check
        %p193 = pneg %p192
      $region22: #{tpu_custom_call.1} parent=5 // pred_check_branch
        %195 = sbr.rel (%p193) target = $region24
      $region23: #{tpu_custom_call.1} parent=5 // pred_region
        // Predicated region
        $region25: #{tpu_custom_call.1} parent=23 // pred_check
          %p196 = pneg %p53
        $region26: #{tpu_custom_call.1} parent=23 // pred_check_branch
          %198 = sbr.rel (%p196) target = $region28
        $region27: #{tpu_custom_call.1} parent=23 // pred_region
          %s199 = sand.u32 %s43, 1
          %s200 = scalar_lea.sflag [#allocation3], %s199
          %s201 = sand.u32 %s43, 1
          %s202 = smul.addr %s201, 8
          %s203 = scalar_lea.vmem [#allocation2], %s202
          %s204 = smul.u32 2, %s27
          %s205 = ssub.s32 3, %s204
          %p206 = scmp.lt.s32.totalorder %s205, 2
          %s207 = scalar_select %p206, %s205, 2
          %s208 = smul.u32 64, %s207
          %s210 = ssub.s32 128, %s208
          %211 = vsyncadd %s200, %s210
          %p212 = scmp.ne.s32.totalorder 0, %s208
          %s213 = smul.addr %s26, 3
          %s214 = sadd.s32 %s204, %s213
          %s215 = smul.addr %s214, 64
          %s216 = scalar_lea.hbm %s0, %s215
          %s217 = smul.u32 4, %s207
          %s218 = sshll.u32 %s203, 4
          %s219 = int_to_ptr.vmem [resolvable:$true] %s218
          %s220 = sshll.u32 %s217, 4
          %224 = dma.hbm_to_vmem [thread:$0]  (%p212), %s216, %s220, %s219, %s200, 64, 64, 4
        $region28: #{tpu_custom_call.1} parent=23 // pred_fallthru
          _
        // Predicated region
        $region29: #{tpu_custom_call.1} parent=23 // pred_check
          %p225 = pneg %p85
        $region30: #{tpu_custom_call.1} parent=23 // pred_check_branch
          %227 = sbr.rel (%p225) target = $region32
        $region31: #{tpu_custom_call.1} parent=23 // pred_region
          %s228 = sand.u32 %s19, 1
          %s229 = scalar_lea.sflag [#allocation6], %s228
          %s230 = sand.u32 %s75, 1
          %s231 = smul.addr %s230, 4
          %s232 = scalar_lea.vmem [#allocation5], %s231
          %s233 = sadd.s32 %s27, 1
          %s234 = smul.u32 %s233, 2
          %s236 = ssub.s32 64, 64
          %237 = vsyncadd %s229, %s236
          %s238 = smul.addr %s26, 3
          %s239 = sadd.s32 %s234, %s238
          %s240 = smul.addr %s239, 64
          %s241 = scalar_lea.hbm %s1, %s240
          %s243 = sshll.u32 %s232, 4
          %s244 = int_to_ptr.vmem [resolvable:$true] %s243
          %246 = dma.hbm_to_vmem [thread:$0]  %s241, 64, %s244, %s229
        $region32: #{tpu_custom_call.1} parent=23 // pred_fallthru
          _
      $region24: #{tpu_custom_call.1} parent=5 // pred_fallthru
        _
      %p247 = scmp.le.s32.totalorder 1, %s19
      %p248 = scmp.lt.s32.totalorder %s19, 3
      %p249 = pnand %p247, %p248
      %p250 = pneg %p249
      // Predicated region
      $region33: #{tpu_custom_call.1} parent=5 // pred_check
        _
      $region34: #{tpu_custom_call.1} parent=5 // pred_check_branch
        %252 = sbr.rel (%p249) target = $region36
      $region35: #{tpu_custom_call.1} parent=5 // pred_region
        %s253 = ssub.s32 %s19, 1
        %s254 = sand.u32 %s46, 1
        %s255 = scalar_lea.sflag [#allocation3], %s254
        %s256 = sand.u32 %s46, 1
        %s257 = smul.addr %s256, 8
        %s258 = scalar_lea.vmem [#allocation2], %s257
        // Predicated region
        $region37: #{tpu_custom_call.1} parent=35 // pred_check
          %p259 = pneg %p59
        $region38: #{tpu_custom_call.1} parent=35 // pred_check_branch
          %261 = sbr.rel (%p259) target = $region40
        $region39: #{tpu_custom_call.1} parent=35 // pred_region
          %262 = dma.done %s255, 128
        $region40: #{tpu_custom_call.1} parent=35 // pred_fallthru
          _
        %s263 = sand.u32 %s24, 1
        %s264 = scalar_lea.sflag [#allocation6], %s263
        %s265 = sand.u32 %s78, 1
        %s266 = smul.addr %s265, 4
        %s267 = scalar_lea.vmem [#allocation5], %s266
        // Predicated region
        $region41: #{tpu_custom_call.1} parent=35 // pred_check
          %p268 = pneg %p91
        $region42: #{tpu_custom_call.1} parent=35 // pred_check_branch
          %270 = sbr.rel (%p268) target = $region44
        $region43: #{tpu_custom_call.1} parent=35 // pred_region
          %271 = dma.done %s264, 64
        $region44: #{tpu_custom_call.1} parent=35 // pred_fallthru
          _
        // Predicated region
        $region45: #{tpu_custom_call.1} parent=35 // pred_check
          %p272 = pneg %p112
        $region46: #{tpu_custom_call.1} parent=35 // pred_check_branch
          %274 = sbr.rel (%p272) target = $region48
        $region47: #{tpu_custom_call.1} parent=35 // pred_region
          %275 = dma.done [#allocation6], 3072
        $region48: #{tpu_custom_call.1} parent=35 // pred_fallthru
          _
        %s276 = sand.u32 %s46, 1
        %s277 = scalar_lea.sflag [#allocation3], %s276
        %s278 = sand.u32 %s46, 1
        %s279 = smul.addr %s278, 8
        %s280 = scalar_lea.vmem [#allocation2], %s279
        %p281 = pneg %p59
        %p282 = pneg %p56
        %s283 = sand.u32 %s24, 1
        %s284 = scalar_lea.sflag [#allocation6], %s283
        %s285 = sand.u32 %s78, 1
        %s286 = smul.addr %s285, 4
        %s287 = scalar_lea.vmem [#allocation5], %s286
        %p288 = pneg %p91
        %p289 = pneg %p88
        %p290 = pneg %p112
        %p291 = pneg %p109
        %p292 = pneg %p133
        %p293 = pneg %p130
        %p294 = pneg %p161
        %p295 = pneg %p158
        %s296 = sand.u32 %s148, 1
        %s297 = scalar_lea.sflag [#allocation4], %s296
        %s298 = sand.u32 %s148, 1
        %s299 = smul.addr %s298, 16
        %s300 = scalar_lea.vmem [#allocation8], %s299
        %s301 = smul.u32 2, %s29
        %s302 = ssub.s32 3, %s301
        %p303 = scmp.lt.s32.totalorder %s302, 2
        %s304 = scalar_select %p303, %s302, 2
        %s305 = smul.u32 64, %s304
        %s306 = sadd.s32 %s29, 1
        %s307 = smul.u32 %s306, 2
        %s308 = smul.u32 2, %s29
        %v310 = vld [vmem:[%s258] sm:$0xf]
        %v311 = vld [vmem:[%s258 + $0x4] sm:$0xf]
        %v312 = vld [vmem:[%s267] sm:$0xf]
        %v315 = vunpack.c.l.b16 %v310
        %v316 = vunpack.c.l.b16 %v311
        %v317 = vpack.c.b16 %v316, %v315
        %vm319 = vsmask.f32 7424
        %v321 = vshrl.u32 %v317, 16
        %v323 = vshll.u32 %v317, 16
        %v325 = vrot.slane %v323, 1
        %v326 = vor.u32 %v321, %v325
        %v328 = vshll.u32 %v312, 16
        %v330 = vrot.slane %v328, 1
        %v331 = vsel %vm319, %v326, %v330
        %vm334 = vcmask 1046528
        %v335 = vrot.slane %v317, 1
        %v336 = vrot.slane %v312, 1
        %v337 = vsel %vm334, %v335, %v336
        %v339 = vld [vmem:[#allocation7] sm:$0xf]
        %v340 = vld [vmem:[#allocation7 + $0x4] sm:$0xf]
        %v341 = vld [vmem:[#allocation7 + $0x8] sm:$0xf]
        %v342 = vld [vmem:[#allocation7 + $0xc] sm:$0xf]
        %v343 = vld [vmem:[#allocation7 + $0x10] sm:$0xf]
        %v344 = vld [vmem:[#allocation7 + $0x14] sm:$0xf]
        %v345 = vld [vmem:[#allocation7 + $0x18] sm:$0xf]
        %v346 = vld [vmem:[#allocation7 + $0x1c] sm:$0xf]
        %v347 = vld [vmem:[#allocation7 + $0x20] sm:$0xf]
        %v348 = vld [vmem:[#allocation7 + $0x24] sm:$0xf]
        %v349 = vld [vmem:[#allocation7 + $0x28] sm:$0xf]
        %v350 = vld [vmem:[#allocation7 + $0x2c] sm:$0xf]
        %v351 = vld [vmem:[#allocation7 + $0x30] sm:$0xf]
        %v352 = vld [vmem:[#allocation7 + $0x34] sm:$0xf]
        %v353 = vld [vmem:[#allocation7 + $0x38] sm:$0xf]
        %v354 = vld [vmem:[#allocation7 + $0x3c] sm:$0xf]
        %v355 = vld [vmem:[#allocation7 + $0x40] sm:$0xf]
        %v356 = vld [vmem:[#allocation7 + $0x44] sm:$0xf]
        %v357 = vld [vmem:[#allocation7 + $0x48] sm:$0xf]
        %v358 = vld [vmem:[#allocation7 + $0x4c] sm:$0xf]
        %v359 = vld [vmem:[#allocation7 + $0x50] sm:$0xf]
        %v360 = vld [vmem:[#allocation7 + $0x54] sm:$0xf]
        %v361 = vld [vmem:[#allocation7 + $0x58] sm:$0xf]
        %v362 = vld [vmem:[#allocation7 + $0x5c] sm:$0xf]
        %v363 = vld [vmem:[#allocation7 + $0x60] sm:$0xf]
        %v364 = vld [vmem:[#allocation7 + $0x64] sm:$0xf]
        %v365 = vld [vmem:[#allocation7 + $0x68] sm:$0xf]
        %v366 = vld [vmem:[#allocation7 + $0x6c] sm:$0xf]
        %v367 = vld [vmem:[#allocation7 + $0x70] sm:$0xf]
        %v368 = vld [vmem:[#allocation7 + $0x74] sm:$0xf]
        %v369 = vld [vmem:[#allocation7 + $0x78] sm:$0xf]
        %v370 = vld [vmem:[#allocation7 + $0x7c] sm:$0xf]
        %v371 = vld [vmem:[#allocation7 + $0x80] sm:$0xf]
        %v372 = vld [vmem:[#allocation7 + $0x84] sm:$0xf]
        %v373 = vld [vmem:[#allocation7 + $0x88] sm:$0xf]
        %v374 = vld [vmem:[#allocation7 + $0x8c] sm:$0xf]
        %v375 = vld [vmem:[#allocation7 + $0x90] sm:$0xf]
        %v376 = vld [vmem:[#allocation7 + $0x94] sm:$0xf]
        %v377 = vld [vmem:[#allocation7 + $0x98] sm:$0xf]
        %v378 = vld [vmem:[#allocation7 + $0x9c] sm:$0xf]
        %v379 = vld [vmem:[#allocation7 + $0xa0] sm:$0xf]
        %v380 = vld [vmem:[#allocation7 + $0xa4] sm:$0xf]
        %v381 = vld [vmem:[#allocation7 + $0xa8] sm:$0xf]
        %v382 = vld [vmem:[#allocation7 + $0xac] sm:$0xf]
        %v383 = vld [vmem:[#allocation7 + $0xb0] sm:$0xf]
        %v384 = vld [vmem:[#allocation7 + $0xb4] sm:$0xf]
        %v385 = vld [vmem:[#allocation7 + $0xb8] sm:$0xf]
        %v386 = vld [vmem:[#allocation7 + $0xbc] sm:$0xf]
        %v387 = vld [vmem:[%s3] sm:$0x1]
        %v389 = vlaneseq
        %v390 = vshrl.u32 %v389, 7
        %v391 = vsub.s32 0, %v390
        %v392 = vrot.slane %v387, %v391
        %v442 = vunpack.c.l.b16 %v339
        %v443 = vunpack.c.l.b16 %v340
        %v444 = vunpack.c.l.b16 %v341
        %v445 = vunpack.c.l.b16 %v342
        %v446 = vunpack.c.l.b16 %v343
        %v447 = vunpack.c.l.b16 %v344
        %v448 = vunpack.c.l.b16 %v345
        %v449 = vunpack.c.l.b16 %v346
        %v450 = vunpack.c.l.b16 %v347
        %v451 = vunpack.c.l.b16 %v348
        %v452 = vunpack.c.l.b16 %v349
        %v453 = vunpack.c.l.b16 %v350
        %v454 = vunpack.c.l.b16 %v351
        %v455 = vunpack.c.l.b16 %v352
        %v456 = vunpack.c.l.b16 %v353
        %v457 = vunpack.c.l.b16 %v354
        %v458 = vunpack.c.l.b16 %v355
        %v459 = vunpack.c.l.b16 %v356
        %v460 = vunpack.c.l.b16 %v357
        %v461 = vunpack.c.l.b16 %v358
        %v462 = vunpack.c.l.b16 %v359
        %v463 = vunpack.c.l.b16 %v360
        %v464 = vunpack.c.l.b16 %v361
        %v465 = vunpack.c.l.b16 %v362
        %v466 = vunpack.c.l.b16 %v363
        %v467 = vunpack.c.l.b16 %v364
        %v468 = vunpack.c.l.b16 %v365
        %v469 = vunpack.c.l.b16 %v366
        %v470 = vunpack.c.l.b16 %v367
        %v471 = vunpack.c.l.b16 %v368
        %v472 = vunpack.c.l.b16 %v369
        %v473 = vunpack.c.l.b16 %v370
        %v474 = vunpack.c.l.b16 %v371
        %v475 = vunpack.c.l.b16 %v372
        %v476 = vunpack.c.l.b16 %v373
        %v477 = vunpack.c.l.b16 %v374
        %v478 = vunpack.c.l.b16 %v375
        %v479 = vunpack.c.l.b16 %v376
        %v480 = vunpack.c.l.b16 %v377
        %v481 = vunpack.c.l.b16 %v378
        %v482 = vunpack.c.l.b16 %v379
        %v483 = vunpack.c.l.b16 %v380
        %v484 = vunpack.c.l.b16 %v381
        %v485 = vunpack.c.l.b16 %v382
        %v486 = vunpack.c.l.b16 %v383
        %v487 = vunpack.c.l.b16 %v384
        %v488 = vunpack.c.l.b16 %v385
        %v489 = vunpack.c.l.b16 %v386
        %v490 = vpack.c.b16 %v443, %v442
        %v491 = vpack.c.b16 %v445, %v444
        %v492 = vpack.c.b16 %v447, %v446
        %v493 = vpack.c.b16 %v449, %v448
        %v494 = vpack.c.b16 %v451, %v450
        %v495 = vpack.c.b16 %v453, %v452
        %v496 = vpack.c.b16 %v455, %v454
        %v497 = vpack.c.b16 %v457, %v456
        %v498 = vpack.c.b16 %v459, %v458
        %v499 = vpack.c.b16 %v461, %v460
        %v500 = vpack.c.b16 %v463, %v462
        %v501 = vpack.c.b16 %v465, %v464
        %v502 = vpack.c.b16 %v467, %v466
        %v503 = vpack.c.b16 %v469, %v468
        %v504 = vpack.c.b16 %v471, %v470
        %v505 = vpack.c.b16 %v473, %v472
        %v506 = vpack.c.b16 %v475, %v474
        %v507 = vpack.c.b16 %v477, %v476
        %v508 = vpack.c.b16 %v479, %v478
        %v509 = vpack.c.b16 %v481, %v480
        %v510 = vpack.c.b16 %v483, %v482
        %v511 = vpack.c.b16 %v485, %v484
        %v512 = vpack.c.b16 %v487, %v486
        %v513 = vpack.c.b16 %v489, %v488
        %538 = vmatprep.subr.bf16.mxu0 0
        %539 = vmatpush1.bf16.msra.mxu0 %v497
        %540 = vmatprep.subr.bf16.mxu0 0
        %541 = vmatpush1.bf16.msra.mxu0 %v496
        %542 = vmatprep.subr.bf16.mxu0 0
        %543 = vmatpush1.bf16.msra.mxu0 %v495
        %544 = vmatprep.subr.bf16.mxu0 0
        %545 = vmatpush1.bf16.msra.mxu0 %v494
        %546 = vmatprep.subr.bf16.mxu0 0
        %547 = vmatpush1.bf16.msra.mxu0 %v493
        %548 = vmatprep.subr.bf16.mxu0 0
        %549 = vmatpush1.bf16.msra.mxu0 %v492
        %550 = vmatprep.subr.bf16.mxu0 0
        %551 = vmatpush1.bf16.msra.mxu0 %v491
        %552 = vmatprep.subr.bf16.mxu0 0
        %553 = vmatpush1.bf16.msra.mxu0 %v490
        %554 = vmatprep.subr.bf16.mxu0 0
        %555 = vmatpush2.bf16.msra.mxu0 %v505
        %556 = vmatprep.subr.bf16.mxu0 0
        %557 = vmatpush2.bf16.msra.mxu0 %v504
        %558 = vmatprep.subr.bf16.mxu0 0
        %559 = vmatpush2.bf16.msra.mxu0 %v503
        %560 = vmatprep.subr.bf16.mxu0 0
        %561 = vmatpush2.bf16.msra.mxu0 %v502
        %562 = vmatprep.subr.bf16.mxu0 0
        %563 = vmatpush2.bf16.msra.mxu0 %v501
        %564 = vmatprep.subr.bf16.mxu0 0
        %565 = vmatpush2.bf16.msra.mxu0 %v500
        %566 = vmatprep.subr.bf16.mxu0 0
        %567 = vmatpush2.bf16.msra.mxu0 %v499
        %568 = vmatprep.subr.bf16.mxu0 0
        %569 = vmatpush2.bf16.msra.mxu0 %v498
        %570 = vmatprep.mubr.bf16.mxu0 %v331
        %571 = vmatmul.mubr.bf16.gmra.mxu0 %v317
        %v572 = vpop.f32.mrf.mxu0
        %v573 = vadd.f32 %v392, %v572
        %v574 = vpop.f32.mrf.mxu0
        %v575 = vpop.f32.mrf.mxu0
        %v576 = vadd.f32 %v392, %v575
        %v577 = vpop.f32.mrf.mxu0
        %578 = vdwg.mxu0
        %579 = vmatprep.subr.bf16.mxu0 0
        %580 = vmatpush1.bf16.msra.mxu0 %v513
        %581 = vmatprep.subr.bf16.mxu0 0
        %582 = vmatpush1.bf16.msra.mxu0 %v512
        %583 = vmatprep.subr.bf16.mxu0 0
        %584 = vmatpush1.bf16.msra.mxu0 %v511
        %585 = vmatprep.subr.bf16.mxu0 0
        %586 = vmatpush1.bf16.msra.mxu0 %v510
        %587 = vmatprep.subr.bf16.mxu0 0
        %588 = vmatpush1.bf16.msra.mxu0 %v509
        %589 = vmatprep.subr.bf16.mxu0 0
        %590 = vmatpush1.bf16.msra.mxu0 %v508
        %591 = vmatprep.subr.bf16.mxu0 0
        %592 = vmatpush1.bf16.msra.mxu0 %v507
        %593 = vmatprep.subr.bf16.mxu0 0
        %594 = vmatpush1.bf16.msra.mxu0 %v506
        %595 = vmatprep.subr.bf16.mxu0 0
        %596 = vmatpush2.bf16.msra.mxu0 0
        %597 = vmatprep.subr.bf16.mxu0 0
        %598 = vmatpush2.bf16.msra.mxu0 0
        %599 = vmatprep.subr.bf16.mxu0 0
        %600 = vmatpush2.bf16.msra.mxu0 0
        %601 = vmatprep.subr.bf16.mxu0 0
        %602 = vmatpush2.bf16.msra.mxu0 0
        %603 = vmatprep.subr.bf16.mxu0 0
        %604 = vmatpush2.bf16.msra.mxu0 0
        %605 = vmatprep.subr.bf16.mxu0 0
        %606 = vmatpush2.bf16.msra.mxu0 0
        %607 = vmatprep.subr.bf16.mxu0 0
        %608 = vmatpush2.bf16.msra.mxu0 0
        %609 = vmatprep.subr.bf16.mxu0 0
        %610 = vmatpush2.bf16.msra.mxu0 0
        %611 = vmatprep.mubr.bf16.mxu0 0
        %612 = vmatmul.mubr.bf16.gmra.mxu0 %v337
        %v613 = vpop.f32.mrf.mxu0
        %v614 = vadd.f32 %v573, %v613
        %v615 = vpop.f32.mrf.mxu0
        %v616 = vpop.f32.mrf.mxu0
        %v617 = vadd.f32 %v576, %v616
        %v618 = vpop.f32.mrf.mxu0
        %619 = vdwg.mxu0
        %620 = vst [vmem:[%s300] sm:$0xff] %v614
        %621 = vst [vmem:[%s300 + $0x8] sm:$0xff] %v617
        %s622 = sand.u32 %s148, 1
        %s623 = scalar_lea.sflag [#allocation4], %s622
        %s624 = sand.u32 %s148, 1
        %s625 = smul.addr %s624, 16
        %s626 = scalar_lea.vmem [#allocation8], %s625
        // Predicated region
        $region49: #{tpu_custom_call.1} parent=35 // pred_check
          %p627 = pneg %p158
        $region50: #{tpu_custom_call.1} parent=35 // pred_check_branch
          %629 = sbr.rel (%p627) target = $region52
        $region51: #{tpu_custom_call.1} parent=35 // pred_region
          %s630 = smul.u32 2, %s29
          %s632 = ssub.s32 256, 256
          %633 = vsyncadd %s623, %s632
          %s634 = smul.addr %s28, 2
          %s635 = sadd.s32 %s630, %s634
          %s636 = smul.addr %s635, 128
          %s637 = scalar_lea.hbm %s4, %s636
          %s638 = sshll.u32 %s626, 4
          %s639 = int_to_ptr.vmem [resolvable:$true] %s638
          %644 = dma.vmem_to_hbm [thread:$0]  %s639, 256, %s637, %s623, 128, 128, 8
        $region52: #{tpu_custom_call.1} parent=35 // pred_fallthru
          _
      $region36: #{tpu_custom_call.1} parent=5 // pred_fallthru
        _
      %p645 = scmp.le.s32.totalorder 2, %s19
      // Predicated region
      $region53: #{tpu_custom_call.1} parent=5 // pred_check
        %p646 = pneg %p645
      $region54: #{tpu_custom_call.1} parent=5 // pred_check_branch
        %648 = sbr.rel (%p646) target = $region56
      $region55: #{tpu_custom_call.1} parent=5 // pred_region
        %s649 = ssub.s32 %s19, 2
        // Predicated region
        $region57: #{tpu_custom_call.1} parent=55 // pred_check
          %p650 = pneg %p164
        $region58: #{tpu_custom_call.1} parent=55 // pred_check_branch
          %652 = sbr.rel (%p650) target = $region60
        $region59: #{tpu_custom_call.1} parent=55 // pred_region
          %s653 = sand.u32 %s149, 1
          %s654 = scalar_lea.sflag [#allocation4], %s653
          %s655 = sand.u32 %s149, 1
          %s656 = smul.addr %s655, 16
          %s657 = scalar_lea.vmem [#allocation8], %s656
          %658 = dma.done %s654, 256
        $region60: #{tpu_custom_call.1} parent=55 // pred_fallthru
          _
      $region56: #{tpu_custom_call.1} parent=5 // pred_fallthru
        _
    $region6: #{tpu_custom_call.1} parent=1 // loop_footer
      %s23 = sadd.s32 1, %s19
    $region7: #{tpu_custom_call.1} parent=1 // loop_footer_branch
      %18 = sbr.rel target = $region3
    $region8: #{tpu_custom_call.1} parent=1 // loop_exit
      _
    %659 = vsyncpa [#allocation3], 1
    %s660 = scalar_lea.sflag [#allocation3], 1
    %661 = vsyncpa %s660, 1
    %662 = vsyncpa [#allocation6], 1
    %s663 = scalar_lea.sflag [#allocation6], 1
    %664 = vsyncpa %s663, 1
    %665 = vsyncpa [#allocation4], 1
    %s666 = scalar_lea.sflag [#allocation4], 1
    %667 = vsyncpa %s666, 1

</llo_original>
